<compile_context>
chip_gen: v6e
topology: v6e:2x2x1
jax: 0.10.0
libtpu: 0.0.40
codegen_flags: <defaults>
</compile_context>

<pallas_src>
import functools

import jax
import jax.numpy as jnp
from jax.experimental import pallas as pl
from jax.experimental.pallas import tpu as pltpu

LANE = 128          # lane-dense output width (vocab 20 padded up to 128)
NEG_BIG = -1e30     # pad-class bias: exp(NEG_BIG - max) == 0, so softmax is untouched
VOCAB_PAD = 32      # per-context vocab block padded 20 -> 32 so K = ctx*32 = 256 is aligned


def _round_up(x, m):
    return -(-x // m) * m


def _aamodel_kernel(idx_ref, expand_ref, vmod_ref, m1_ref, b1_ref, w2_ref, b2_ref,
                    out_ref, *, matmul_dtype):
    """One batch tile: fused embedding gather + linear1 + relu + linear2 + log_softmax.

    idx_ref    : (tm, ctx)    int32  token indices for this batch tile
    expand_ref : (ctx, kdim)  mm_dt  expand[c, j] = 1 iff j // VOCAB_PAD == c (constant)
    vmod_ref   : (1, kdim)    f32    vmod[0, j]   = j %  VOCAB_PAD            (constant)
    m1_ref     : (kdim, HD)   mm_dt  fused embedding x W1 weight, zero rows on pad vocab ids
    b1_ref     : (1, HD)      f32
    w2_ref     : (HD, LANE)   mm_dt  W2 zero-padded to 128 lanes
    b2_ref     : (1, LANE)    f32    b2, pad lanes = NEG_BIG
    out_ref    : (tm, LANE)   f32    lane-dense log-probs (valid cols are [:20])
    """
    # tgt[i, j] = idx[i, j // VOCAB_PAD]  -- the row "gather" done as a tiny MXU matmul
    # (indices <= 31 are exact in bf16; exactly one nonzero term per output, f32 accum).
    idx = idx_ref[...].astype(matmul_dtype)
    tgt = jnp.dot(idx, expand_ref[...], preferred_element_type=jnp.float32)

    # Single compare builds the multi-hot selector:
    #   oh[i, c*VOCAB_PAD + v] = 1  iff  idx[i, c] == v
    # so  oh @ m1 == concat_c(emb[idx[:, c]]) @ W1  (exactly gather + linear1).
    # TODO(synk): PyTorch nn.Embedding raises on out-of-range indices; here an
    # out-of-range index selects nothing (zero embedding row) instead.
    oh = (tgt == vmod_ref[...]).astype(matmul_dtype)

    # linear1 + relu (MXU matmul, f32 accumulation; element-wise stays f32)
    h = jnp.dot(oh, m1_ref[...], preferred_element_type=jnp.float32) + b1_ref[...]
    h = jnp.maximum(h, 0.0)

    # linear2, padded to a full 128-lane output so the store is lane-dense (no vst.msk)
    logits = jnp.dot(h.astype(matmul_dtype), w2_ref[...],
                     preferred_element_type=jnp.float32) + b2_ref[...]

    # numerically stable log_softmax; pad lanes carry NEG_BIG bias -> exp(.) == 0
    m = jnp.max(logits, axis=-1, keepdims=True)
    shifted = logits - m
    lse = jnp.log(jnp.sum(jnp.exp(shifted), axis=-1, keepdims=True))
    out_ref[...] = shifted - lse


@functools.partial(jax.jit, static_argnames=("tile_m", "matmul_dtype", "pad_output"))
def aamodel_forward_batched(idx, params, *, tile_m=512, matmul_dtype=jnp.bfloat16,
                            pad_output=False):
    """idx: int32 (B, context_size). Returns (B, 20) log-probs; row i == AAModel.forward(idx[i])."""
    emb, w1, b1, w2, b2 = (params[k] for k in ("emb", "w1", "b1", "w2", "b2"))
    vocab, emb_dim = emb.shape
    d_in, hd = w1.shape
    n_out = w2.shape[1]
    ctx = d_in // emb_dim
    batch = idx.shape[0]
    kdim = ctx * VOCAB_PAD

    # --- tiny weight prep (done once per jit; weights reused across the whole batch) ---
    # Fuse embedding and linear1: m1[c, v, h] = sum_e emb[v, e] * w1[c*emb_dim + e, h]
    # (broadcast + sum over emb_dim=2 -> exact f32), then pad each context block to 32 rows.
    w1r = w1.reshape(ctx, emb_dim, hd)
    m1 = (emb[None, :, :, None] * w1r[:, None, :, :]).sum(axis=2)          # (ctx, vocab, hd)
    m1 = jnp.zeros((ctx, VOCAB_PAD, hd), jnp.float32).at[:, :vocab, :].set(m1)
    m1 = m1.reshape(kdim, hd).astype(matmul_dtype)                          # pre-cast once

    # Constant selector tables for the in-kernel one-hot build (VMEM-resident).
    col = jnp.arange(kdim, dtype=jnp.int32)
    expand = (jnp.arange(ctx, dtype=jnp.int32)[:, None] == (col // VOCAB_PAD)[None, :])
    expand = expand.astype(matmul_dtype)                                    # (ctx, kdim)
    vmod = (col % VOCAB_PAD).astype(jnp.float32).reshape(1, kdim)           # (1, kdim)

    # Lane-dense linear2: zero-pad weights to 128 lanes, NEG_BIG bias on pad lanes.
    w2p = jnp.zeros((hd, LANE), jnp.float32).at[:, :n_out].set(w2).astype(matmul_dtype)
    b2p = jnp.full((1, LANE), NEG_BIG, jnp.float32).at[:, :n_out].set(b2.reshape(1, -1))

    # Tile selection: big tiles amortize the ~600-cycle per-step overhead, but keep >= 2
    # grid steps when batch allows so both v7x TensorCores get work.
    tm = min(tile_m, max(8, _round_up(pl.cdiv(batch, 2), 8)))
    bp = pl.cdiv(batch, tm) * tm
    idx_p = jnp.pad(idx.astype(jnp.int32), ((0, bp - batch), (0, 0)))

    out = pl.pallas_call(
        functools.partial(_aamodel_kernel, matmul_dtype=matmul_dtype),
        out_shape=jax.ShapeDtypeStruct((bp, LANE), jnp.float32),
        grid_spec=pltpu.PrefetchScalarGridSpec(
            num_scalar_prefetch=0,
            grid=(bp // tm,),
            in_specs=[
                pl.BlockSpec((tm, ctx), lambda i: (i, 0)),       # per-tile indices
                pl.BlockSpec((ctx, kdim), lambda i: (0, 0)),     # constants stay VMEM-resident
                pl.BlockSpec((1, kdim), lambda i: (0, 0)),
                pl.BlockSpec((kdim, hd), lambda i: (0, 0)),      # fused weight stays resident
                pl.BlockSpec((1, hd), lambda i: (0, 0)),
                pl.BlockSpec((hd, LANE), lambda i: (0, 0)),
                pl.BlockSpec((1, LANE), lambda i: (0, 0)),
            ],
            out_specs=pl.BlockSpec((tm, LANE), lambda i: (i, 0)),
        ),
        compiler_params=pltpu.CompilerParams(
            dimension_semantics=("parallel",),  # batch tiles can split across TCs (v7x)
        ),
    )(idx_p, expand, vmod, m1, b1.reshape(1, -1), w2p, b2p)

    if pad_output:
        # Skip the trimming copy (an extra HBM read/write pass) when the consumer can use
        # the padded lane-dense buffer directly; valid rows are [:batch], cols [:n_out].
        return out
    return out[:batch, :n_out]


def aamodel_forward(inputs, params):
    """Spec-shaped forward matching AAModel: inputs int32 (context_size,) -> (1, 20)."""
    return aamodel_forward_batched(inputs.reshape(1, -1), params)


def init_params(key, context_size, hd, vocab=20, emb_dim=2):
    k_emb, k_w1, k_b1, k_w2, k_b2 = jax.random.split(key, 5)
    d_in = context_size * emb_dim
    return {
        "emb": jax.random.normal(k_emb, (vocab, emb_dim), jnp.float32),
        # linear weights stored as (in, out), i.e. transposed vs. torch's (out, in)
        "w1": jax.random.normal(k_w1, (d_in, hd), jnp.float32) * 0.1,
        "b1": jax.random.normal(k_b1, (hd,), jnp.float32) * 0.1,
        "w2": jax.random.normal(k_w2, (hd, vocab), jnp.float32) * 0.1,
        "b2": jax.random.normal(k_b2, (vocab,), jnp.float32) * 0.1,
    }


def _reference_forward_batched(idx, params):
    hi = jax.lax.Precision.HIGHEST
    rep = jnp.take(params["emb"], idx, axis=0).reshape(idx.shape[0], -1)
    h = jnp.maximum(jnp.dot(rep, params["w1"], precision=hi) + params["b1"], 0.0)
    logits = jnp.dot(h, params["w2"], precision=hi) + params["b2"]
    return jax.nn.log_softmax(logits, axis=-1)


if __name__ == "__main__":
    context_size, hd, batch = 8, 32, 256
    key = jax.random.PRNGKey(0)
    k_in, k_p = jax.random.split(key)

    params = init_params(k_p, context_size, hd)
    idx = jax.random.randint(k_in, (batch, context_size), 0, 20, dtype=jnp.int32)

    out = jax.block_until_ready(aamodel_forward_batched(idx, params))
    ref = _reference_forward_batched(idx, params)
    assert out.shape == (batch, 20)
    # tolerance budgets for bf16 MXU operands (weights + activations); accumulation is f32
    max_err = float(jnp.max(jnp.abs(out - ref)))
    assert jnp.allclose(out, ref, atol=2e-2, rtol=1e-4), max_err

    # Spec-shaped single-context call (AAModel.forward returns (1, 20) log-probs).
    single = jax.block_until_ready(aamodel_forward(idx[0], params))
    assert single.shape == (1, 20)
    assert jnp.allclose(single, ref[:1], atol=2e-2, rtol=1e-4)

    print("KERNEL_OK")
</pallas_src>

<mosaic_0001>
module attributes {stable_mosaic.version = 11 : i64} {
  func.func @_aamodel_kernel(%arg0: i32, %arg1: memref<128x8xi32, #tpu.memory_space<vmem>>, %arg2: memref<8x256xbf16, #tpu.memory_space<vmem>>, %arg3: memref<1x256xf32, #tpu.memory_space<vmem>>, %arg4: memref<256x32xbf16, #tpu.memory_space<vmem>>, %arg5: memref<1x32xf32, #tpu.memory_space<vmem>>, %arg6: memref<32x128xbf16, #tpu.memory_space<vmem>>, %arg7: memref<1x128xf32, #tpu.memory_space<vmem>>, %arg8: memref<128x128xf32, #tpu.memory_space<vmem>>) attributes {dimension_semantics = [#tpu.dimension_semantics<parallel>], iteration_bounds = array<i64: 2>, scalar_prefetch = 0 : i64, scratch_operands = 0 : i64, tpu.core_type = #tpu.core_type<tc>, window_params = [{transform_indices = @transform_0, window_bounds = array<i64: 128, 8>}, {pipeline_mode = #tpu.pipeline_mode<synchronous>, transform_indices = @transform_1, window_bounds = array<i64: 8, 256>}, {pipeline_mode = #tpu.pipeline_mode<synchronous>, transform_indices = @transform_2, window_bounds = array<i64: 1, 256>}, {pipeline_mode = #tpu.pipeline_mode<synchronous>, transform_indices = @transform_3, window_bounds = array<i64: 256, 32>}, {pipeline_mode = #tpu.pipeline_mode<synchronous>, transform_indices = @transform_4, window_bounds = array<i64: 1, 32>}, {pipeline_mode = #tpu.pipeline_mode<synchronous>, transform_indices = @transform_5, window_bounds = array<i64: 32, 128>}, {pipeline_mode = #tpu.pipeline_mode<synchronous>, transform_indices = @transform_6, window_bounds = array<i64: 1, 128>}, {transform_indices = @transform_7, window_bounds = array<i64: 128, 128>}]} {
    %c0 = arith.constant 0 : index
    %c0_0 = arith.constant 0 : index
    %0 = vector.load %arg1[%c0, %c0_0] : memref<128x8xi32, #tpu.memory_space<vmem>>, vector<128x8xi32>
    %1 = arith.sitofp %0 : vector<128x8xi32> to vector<128x8xbf16>
    %c0_1 = arith.constant 0 : index
    %c0_2 = arith.constant 0 : index
    %2 = vector.load %arg2[%c0_1, %c0_2] : memref<8x256xbf16, #tpu.memory_space<vmem>>, vector<8x256xbf16>
    %cst = arith.constant dense<0.000000e+00> : vector<128x256xf32>
    %3 = tpu.matmul %1, %2, %cst {dimension_numbers = #tpu.dot_dimension_numbers<[1], [0], [0], [1], [0, 0, 1, 1], [], []>} : vector<128x8xbf16>, vector<8x256xbf16>, vector<128x256xf32> -> vector<128x256xf32>
    %c0_3 = arith.constant 0 : index
    %c0_4 = arith.constant 0 : index
    %4 = vector.load %arg3[%c0_3, %c0_4] : memref<1x256xf32, #tpu.memory_space<vmem>>, vector<1x256xf32>
    %5 = vector.broadcast %4 : vector<1x256xf32> to vector<128x256xf32>
    %6 = arith.cmpf oeq, %3, %5 : vector<128x256xf32>
    %7 = arith.extui %6 : vector<128x256xi1> to vector<128x256xi32>
    %8 = arith.sitofp %7 : vector<128x256xi32> to vector<128x256xf32>
    %9 = arith.truncf %8 : vector<128x256xf32> to vector<128x256xbf16>
    %c0_5 = arith.constant 0 : index
    %c0_6 = arith.constant 0 : index
    %10 = vector.load %arg4[%c0_5, %c0_6] : memref<256x32xbf16, #tpu.memory_space<vmem>>, vector<256x32xbf16>
    %cst_7 = arith.constant dense<0.000000e+00> : vector<128x32xf32>
    %11 = tpu.matmul %9, %10, %cst_7 {dimension_numbers = #tpu.dot_dimension_numbers<[1], [0], [0], [1], [0, 0, 1, 1], [], []>} : vector<128x256xbf16>, vector<256x32xbf16>, vector<128x32xf32> -> vector<128x32xf32>
    %c0_8 = arith.constant 0 : index
    %c0_9 = arith.constant 0 : index
    %12 = vector.load %arg5[%c0_8, %c0_9] : memref<1x32xf32, #tpu.memory_space<vmem>>, vector<1x32xf32>
    %13 = vector.broadcast %12 : vector<1x32xf32> to vector<128x32xf32>
    %14 = arith.addf %11, %13 : vector<128x32xf32>
    %cst_10 = arith.constant 0.000000e+00 : f32
    %15 = vector.broadcast %cst_10 : f32 to vector<128x32xf32>
    %16 = arith.maximumf %14, %15 : vector<128x32xf32>
    %17 = arith.truncf %16 : vector<128x32xf32> to vector<128x32xbf16>
    %c0_11 = arith.constant 0 : index
    %c0_12 = arith.constant 0 : index
    %18 = vector.load %arg6[%c0_11, %c0_12] : memref<32x128xbf16, #tpu.memory_space<vmem>>, vector<32x128xbf16>
    %cst_13 = arith.constant dense<0.000000e+00> : vector<128x128xf32>
    %19 = tpu.matmul %17, %18, %cst_13 {dimension_numbers = #tpu.dot_dimension_numbers<[1], [0], [0], [1], [0, 0, 1, 1], [], []>} : vector<128x32xbf16>, vector<32x128xbf16>, vector<128x128xf32> -> vector<128x128xf32>
    %c0_14 = arith.constant 0 : index
    %c0_15 = arith.constant 0 : index
    %20 = vector.load %arg7[%c0_14, %c0_15] : memref<1x128xf32, #tpu.memory_space<vmem>>, vector<1x128xf32>
    %21 = vector.broadcast %20 : vector<1x128xf32> to vector<128x128xf32>
    %22 = arith.addf %19, %21 : vector<128x128xf32>
    %cst_16 = arith.constant dense<0xFF800000> : vector<128xf32>
    %23 = vector.multi_reduction <maximumf>, %22, %cst_16 [1] : vector<128x128xf32> to vector<128xf32>
    %24 = vector.shape_cast %23 : vector<128xf32> to vector<128x1xf32>
    %25 = vector.broadcast %24 : vector<128x1xf32> to vector<128x128xf32>
    %26 = arith.subf %22, %25 : vector<128x128xf32>
    %27 = math.exp %26 : vector<128x128xf32>
    %cst_17 = arith.constant dense<0.000000e+00> : vector<128xf32>
    %28 = vector.multi_reduction <add>, %27, %cst_17 [1] : vector<128x128xf32> to vector<128xf32>
    %29 = vector.shape_cast %28 : vector<128xf32> to vector<128x1xf32>
    %30 = math.log %29 : vector<128x1xf32>
    %31 = vector.broadcast %30 : vector<128x1xf32> to vector<128x128xf32>
    %32 = arith.subf %26, %31 : vector<128x128xf32>
    %c0_18 = arith.constant 0 : index
    %c0_19 = arith.constant 0 : index
    %33 = vector.load %arg8[%c0_18, %c0_19] : memref<128x128xf32, #tpu.memory_space<vmem>>, vector<128x128xf32>
    tpu.vector_store %arg8[%c0_18, %c0_19], %32 {strides = array<i32>} : memref<128x128xf32, #tpu.memory_space<vmem>>, vector<128x128xf32>,
    return
  }
  func.func @transform_0(%arg0: i32) -> (i32, i32) {
    %c0_i32 = arith.constant 0 : i32
    %c0_i32_0 = arith.constant 0 : i32
    return %arg0, %c0_i32 : i32, i32
  }
  func.func @transform_1(%arg0: i32) -> (i32, i32) {
    %c0_i32 = arith.constant 0 : i32
    %c0_i32_0 = arith.constant 0 : i32
    %c0_i32_1 = arith.constant 0 : i32
    return %c0_i32, %c0_i32_0 : i32, i32
  }
  func.func @transform_2(%arg0: i32) -> (i32, i32) {
    %c0_i32 = arith.constant 0 : i32
    %c0_i32_0 = arith.constant 0 : i32
    %c0_i32_1 = arith.constant 0 : i32
    return %c0_i32, %c0_i32_0 : i32, i32
  }
  func.func @transform_3(%arg0: i32) -> (i32, i32) {
    %c0_i32 = arith.constant 0 : i32
    %c0_i32_0 = arith.constant 0 : i32
    %c0_i32_1 = arith.constant 0 : i32
    return %c0_i32, %c0_i32_0 : i32, i32
  }
  func.func @transform_4(%arg0: i32) -> (i32, i32) {
    %c0_i32 = arith.constant 0 : i32
    %c0_i32_0 = arith.constant 0 : i32
    %c0_i32_1 = arith.constant 0 : i32
    return %c0_i32, %c0_i32_0 : i32, i32
  }
  func.func @transform_5(%arg0: i32) -> (i32, i32) {
    %c0_i32 = arith.constant 0 : i32
    %c0_i32_0 = arith.constant 0 : i32
    %c0_i32_1 = arith.constant 0 : i32
    return %c0_i32, %c0_i32_0 : i32, i32
  }
  func.func @transform_6(%arg0: i32) -> (i32, i32) {
    %c0_i32 = arith.constant 0 : i32
    %c0_i32_0 = arith.constant 0 : i32
    %c0_i32_1 = arith.constant 0 : i32
    return %c0_i32, %c0_i32_0 : i32, i32
  }
  func.func @transform_7(%arg0: i32) -> (i32, i32) {
    %c0_i32 = arith.constant 0 : i32
    %c0_i32_0 = arith.constant 0 : i32
    return %arg0, %c0_i32 : i32, i32
  }
}

</mosaic_0001>

<llo_original>
// kernel: aamodel_forward_batched.1
$region0: #{aamodel_forward_batched.1}
  #allocation0 [shape = 'u32[]', space=smem, size = 0x4, offset = 0x4, fixed_abs, tag = 'smem constant byte address 0x4 - core index']
  #allocation1 [shape = 'u32[144,128]{1,0:T(1,128)}', space=vmem, size = 0x12000, scoped, tag = 'internal scratch']
  %s0 = inlined_call_operand.vmem [shape: s32[256,8], index: 0, kind: input, shape index: {}]
  %s1 = inlined_call_operand.vmem [shape: bf16[8,256], index: 1, kind: input, shape index: {}]
  %s2 = inlined_call_operand.vmem [shape: f32[1,256], index: 2, kind: input, shape index: {}]
  %s3 = inlined_call_operand.vmem [shape: bf16[256,32], index: 3, kind: input, shape index: {}]
  %s4 = inlined_call_operand.vmem [shape: f32[1,32], index: 4, kind: input, shape index: {}]
  %s5 = inlined_call_operand.vmem [shape: bf16[32,128], index: 5, kind: input, shape index: {}]
  %s6 = inlined_call_operand.vmem [shape: f32[1,128], index: 6, kind: input, shape index: {}]
  %s7 = inlined_call_operand.vmem [shape: f32[256,128], index: 7, kind: output, shape index: {}]
  %s8 = sld [smem:[#allocation0]]
  $region61: #{aamodel_forward_batched.1} parent=0
    _
  %s10 = ssub.s32 1, %s8
  %s11 = scalar_select 0, %s10, %s8
  loop: start=0, step=1, limit=4
  $region2: #{aamodel_forward_batched.1} parent=0 // loop_pre_header
    _
  $region3: #{aamodel_forward_batched.1} parent=0 // loop_header
    %s13 = sphi 0, %s17
    %p14 = scmp.ge.s32.totalorder %s13, 4
    %s23 = sphi 0, %s25
    %s26 = sphi 0, %s23
    %s27 = sphi 0, %s26
    %s43 = sphi 0, %s27
    %s47 = sphi 0, %s47
    %s49 = sphi 0, %s47
    %s50 = sphi 0, %s49
    %s64 = sphi 0, %s50
    %s68 = sphi 0, %s68
    %s70 = sphi 0, %s68
    %s71 = sphi 0, %s70
    %s85 = sphi 0, %s71
    %s89 = sphi 0, %s89
    %s91 = sphi 0, %s89
    %s92 = sphi 0, %s91
    %s106 = sphi 0, %s92
    %s110 = sphi 0, %s110
    %s112 = sphi 0, %s110
    %s113 = sphi 0, %s112
    %s127 = sphi 0, %s113
    %s131 = sphi 0, %s131
    %s133 = sphi 0, %s131
    %s134 = sphi 0, %s133
    %s148 = sphi 0, %s134
    %s152 = sphi 0, %s152
    %s154 = sphi 0, %s152
    %s155 = sphi 0, %s154
    %s169 = sphi 0, %s155
    %s175 = sphi 0, %s177
    %s178 = sphi 0, %s175
    %s179 = sphi 0, %s178
    %s195 = sphi 0, %s179
  $region4: #{aamodel_forward_batched.1} parent=0 // loop_header_branch
    %16 = sbr.rel (%p14) target = $region8
  $region5: #{aamodel_forward_batched.1} parent=0 // loop_body
    %s18 = ssub.s32 %s13, 1
    %s19 = ssub.s32 %s13, 2
    %s20 = sadd.s32 %s13, 1
    %s21 = ssub.s32 %s13, %s20
    %p22 = scmp.eq.s32.totalorder %s21, 0
    %s24 = sadd.s32 %s23, 1
    %s25 = scalar_select %p22, %s23, %s24
    %p28 = pneg %p22
    %p29 = scmp.eq.s32.totalorder %s13, 1
    %p30 = por %p28, %p29
    %p31 = scmp.ne.s32.totalorder %s23, %s26
    %p32 = scmp.eq.s32.totalorder %s13, 0
    %p33 = por %p31, %p32
    %p34 = scmp.ne.s32.totalorder %s23, %s26
    %p35 = scmp.eq.s32.totalorder %s18, 1
    %p36 = por %p34, %p35
    %p37 = scmp.ne.s32.totalorder %s26, %s27
    %p38 = scmp.eq.s32.totalorder %s18, 0
    %p39 = por %p37, %p38
    %p40 = scmp.ne.s32.totalorder %s26, %s27
    %p41 = scmp.eq.s32.totalorder %s19, 1
    %p42 = por %p40, %p41
    %p44 = scmp.ne.s32.totalorder %s27, %s43
    %p45 = scmp.eq.s32.totalorder %s19, 0
    %p46 = por %p44, %p45
    %s48 = sadd.s32 %s47, 1
    %p51 = scmp.eq.s32.totalorder %s13, 1
    %p52 = scmp.ne.s32.totalorder %s47, %s49
    %p53 = scmp.eq.s32.totalorder %s13, 0
    %p54 = por %p52, %p53
    %p55 = scmp.ne.s32.totalorder %s47, %s49
    %p56 = scmp.eq.s32.totalorder %s18, 1
    %p57 = por %p55, %p56
    %p58 = scmp.ne.s32.totalorder %s49, %s50
    %p59 = scmp.eq.s32.totalorder %s18, 0
    %p60 = por %p58, %p59
    %p61 = scmp.ne.s32.totalorder %s49, %s50
    %p62 = scmp.eq.s32.totalorder %s19, 1
    %p63 = por %p61, %p62
    %p65 = scmp.ne.s32.totalorder %s50, %s64
    %p66 = scmp.eq.s32.totalorder %s19, 0
    %p67 = por %p65, %p66
    %s69 = sadd.s32 %s68, 1
    %p72 = scmp.eq.s32.totalorder %s13, 1
    %p73 = scmp.ne.s32.totalorder %s68, %s70
    %p74 = scmp.eq.s32.totalorder %s13, 0
    %p75 = por %p73, %p74
    %p76 = scmp.ne.s32.totalorder %s68, %s70
    %p77 = scmp.eq.s32.totalorder %s18, 1
    %p78 = por %p76, %p77
    %p79 = scmp.ne.s32.totalorder %s70, %s71
    %p80 = scmp.eq.s32.totalorder %s18, 0
    %p81 = por %p79, %p80
    %p82 = scmp.ne.s32.totalorder %s70, %s71
    %p83 = scmp.eq.s32.totalorder %s19, 1
    %p84 = por %p82, %p83
    %p86 = scmp.ne.s32.totalorder %s71, %s85
    %p87 = scmp.eq.s32.totalorder %s19, 0
    %p88 = por %p86, %p87
    %s90 = sadd.s32 %s89, 1
    %p93 = scmp.eq.s32.totalorder %s13, 1
    %p94 = scmp.ne.s32.totalorder %s89, %s91
    %p95 = scmp.eq.s32.totalorder %s13, 0
    %p96 = por %p94, %p95
    %p97 = scmp.ne.s32.totalorder %s89, %s91
    %p98 = scmp.eq.s32.totalorder %s18, 1
    %p99 = por %p97, %p98
    %p100 = scmp.ne.s32.totalorder %s91, %s92
    %p101 = scmp.eq.s32.totalorder %s18, 0
    %p102 = por %p100, %p101
    %p103 = scmp.ne.s32.totalorder %s91, %s92
    %p104 = scmp.eq.s32.totalorder %s19, 1
    %p105 = por %p103, %p104
    %p107 = scmp.ne.s32.totalorder %s92, %s106
    %p108 = scmp.eq.s32.totalorder %s19, 0
    %p109 = por %p107, %p108
    %s111 = sadd.s32 %s110, 1
    %p114 = scmp.eq.s32.totalorder %s13, 1
    %p115 = scmp.ne.s32.totalorder %s110, %s112
    %p116 = scmp.eq.s32.totalorder %s13, 0
    %p117 = por %p115, %p116
    %p118 = scmp.ne.s32.totalorder %s110, %s112
    %p119 = scmp.eq.s32.totalorder %s18, 1
    %p120 = por %p118, %p119
    %p121 = scmp.ne.s32.totalorder %s112, %s113
    %p122 = scmp.eq.s32.totalorder %s18, 0
    %p123 = por %p121, %p122
    %p124 = scmp.ne.s32.totalorder %s112, %s113
    %p125 = scmp.eq.s32.totalorder %s19, 1
    %p126 = por %p124, %p125
    %p128 = scmp.ne.s32.totalorder %s113, %s127
    %p129 = scmp.eq.s32.totalorder %s19, 0
    %p130 = por %p128, %p129
    %s132 = sadd.s32 %s131, 1
    %p135 = scmp.eq.s32.totalorder %s13, 1
    %p136 = scmp.ne.s32.totalorder %s131, %s133
    %p137 = scmp.eq.s32.totalorder %s13, 0
    %p138 = por %p136, %p137
    %p139 = scmp.ne.s32.totalorder %s131, %s133
    %p140 = scmp.eq.s32.totalorder %s18, 1
    %p141 = por %p139, %p140
    %p142 = scmp.ne.s32.totalorder %s133, %s134
    %p143 = scmp.eq.s32.totalorder %s18, 0
    %p144 = por %p142, %p143
    %p145 = scmp.ne.s32.totalorder %s133, %s134
    %p146 = scmp.eq.s32.totalorder %s19, 1
    %p147 = por %p145, %p146
    %p149 = scmp.ne.s32.totalorder %s134, %s148
    %p150 = scmp.eq.s32.totalorder %s19, 0
    %p151 = por %p149, %p150
    %s153 = sadd.s32 %s152, 1
    %p156 = scmp.eq.s32.totalorder %s13, 1
    %p157 = scmp.ne.s32.totalorder %s152, %s154
    %p158 = scmp.eq.s32.totalorder %s13, 0
    %p159 = por %p157, %p158
    %p160 = scmp.ne.s32.totalorder %s152, %s154
    %p161 = scmp.eq.s32.totalorder %s18, 1
    %p162 = por %p160, %p161
    %p163 = scmp.ne.s32.totalorder %s154, %s155
    %p164 = scmp.eq.s32.totalorder %s18, 0
    %p165 = por %p163, %p164
    %p166 = scmp.ne.s32.totalorder %s154, %s155
    %p167 = scmp.eq.s32.totalorder %s19, 1
    %p168 = por %p166, %p167
    %p170 = scmp.ne.s32.totalorder %s155, %s169
    %p171 = scmp.eq.s32.totalorder %s19, 0
    %p172 = por %p170, %p171
    %s173 = ssub.s32 %s13, %s20
    %p174 = scmp.eq.s32.totalorder %s173, 0
    %s176 = sadd.s32 %s175, 1
    %s177 = scalar_select %p174, %s175, %s176
    %p180 = pneg %p174
    %p181 = scmp.eq.s32.totalorder %s13, 1
    %p182 = por %p180, %p181
    %p183 = scmp.ne.s32.totalorder %s175, %s178
    %p184 = scmp.eq.s32.totalorder %s13, 0
    %p185 = por %p183, %p184
    %p186 = scmp.ne.s32.totalorder %s175, %s178
    %p187 = scmp.eq.s32.totalorder %s18, 1
    %p188 = por %p186, %p187
    %p189 = scmp.ne.s32.totalorder %s178, %s179
    %p190 = scmp.eq.s32.totalorder %s18, 0
    %p191 = por %p189, %p190
    %p192 = scmp.ne.s32.totalorder %s178, %s179
    %p193 = scmp.eq.s32.totalorder %s19, 1
    %p194 = por %p192, %p193
    %p196 = scmp.ne.s32.totalorder %s179, %s195
    %p197 = scmp.eq.s32.totalorder %s19, 0
    %p198 = por %p196, %p197
    %p199 = scmp.le.s32.totalorder 1, %s13
    %p200 = scmp.lt.s32.totalorder %s13, 3
    %p201 = pnand %p199, %p200
    %p202 = pneg %p201
    // Predicated region
    $region9: #{aamodel_forward_batched.1} parent=5 // pred_check
      _
    $region10: #{aamodel_forward_batched.1} parent=5 // pred_check_branch
      %204 = sbr.rel (%p201) target = $region12
    $region11: #{aamodel_forward_batched.1} parent=5 // pred_region
      %s205 = ssub.s32 %s13, 1
      // Predicated region
      $region13: #{aamodel_forward_batched.1} parent=11 // pred_check
        %p206 = pneg %p60
      $region14: #{aamodel_forward_batched.1} parent=11 // pred_check_branch
        %208 = sbr.rel (%p206) target = $region16
      $region15: #{aamodel_forward_batched.1} parent=11 // pred_region
        _
      $region16: #{aamodel_forward_batched.1} parent=11 // pred_fallthru
        _
      // Predicated region
      $region17: #{aamodel_forward_batched.1} parent=11 // pred_check
        %p209 = pneg %p81
      $region18: #{aamodel_forward_batched.1} parent=11 // pred_check_branch
        %211 = sbr.rel (%p209) target = $region20
      $region19: #{aamodel_forward_batched.1} parent=11 // pred_region
        _
      $region20: #{aamodel_forward_batched.1} parent=11 // pred_fallthru
        _
      // Predicated region
      $region21: #{aamodel_forward_batched.1} parent=11 // pred_check
        %p212 = pneg %p102
      $region22: #{aamodel_forward_batched.1} parent=11 // pred_check_branch
        %214 = sbr.rel (%p212) target = $region24
      $region23: #{aamodel_forward_batched.1} parent=11 // pred_region
        _
      $region24: #{aamodel_forward_batched.1} parent=11 // pred_fallthru
        _
      // Predicated region
      $region25: #{aamodel_forward_batched.1} parent=11 // pred_check
        %p215 = pneg %p123
      $region26: #{aamodel_forward_batched.1} parent=11 // pred_check_branch
        %217 = sbr.rel (%p215) target = $region28
      $region27: #{aamodel_forward_batched.1} parent=11 // pred_region
        _
      $region28: #{aamodel_forward_batched.1} parent=11 // pred_fallthru
        _
      // Predicated region
      $region29: #{aamodel_forward_batched.1} parent=11 // pred_check
        %p218 = pneg %p144
      $region30: #{aamodel_forward_batched.1} parent=11 // pred_check_branch
        %220 = sbr.rel (%p218) target = $region32
      $region31: #{aamodel_forward_batched.1} parent=11 // pred_region
        _
      $region32: #{aamodel_forward_batched.1} parent=11 // pred_fallthru
        _
      // Predicated region
      $region33: #{aamodel_forward_batched.1} parent=11 // pred_check
        %p221 = pneg %p165
      $region34: #{aamodel_forward_batched.1} parent=11 // pred_check_branch
        %223 = sbr.rel (%p221) target = $region36
      $region35: #{aamodel_forward_batched.1} parent=11 // pred_region
        _
      $region36: #{aamodel_forward_batched.1} parent=11 // pred_fallthru
        _
    $region12: #{aamodel_forward_batched.1} parent=5 // pred_fallthru
      _
    %p224 = scmp.lt.s32.totalorder %s13, 2
    // Predicated region
    $region37: #{aamodel_forward_batched.1} parent=5 // pred_check
      %p225 = pneg %p224
    $region38: #{aamodel_forward_batched.1} parent=5 // pred_check_branch
      %227 = sbr.rel (%p225) target = $region40
    $region39: #{aamodel_forward_batched.1} parent=5 // pred_region
      // Predicated region
      $region41: #{aamodel_forward_batched.1} parent=39 // pred_check
        %p228 = pneg %p33
      $region42: #{aamodel_forward_batched.1} parent=39 // pred_check_branch
        %230 = sbr.rel (%p228) target = $region44
      $region43: #{aamodel_forward_batched.1} parent=39 // pred_region
        %s231 = smul.u32 16, %s13
        %p232 = scmp.lt.s32.totalorder %s231, 31
        %s233 = scalar_select %p232, %s231, 31
        %s234 = smul.addr %s233, 8
        %s235 = scalar_lea.vmem %s0, %s234
        %s236 = smul.u32 16, %s13
      $region44: #{aamodel_forward_batched.1} parent=39 // pred_fallthru
        _
    $region40: #{aamodel_forward_batched.1} parent=5 // pred_fallthru
      _
    %p237 = scmp.le.s32.totalorder 1, %s13
    %p238 = scmp.lt.s32.totalorder %s13, 3
    %p239 = pnand %p237, %p238
    %p240 = pneg %p239
    // Predicated region
    $region45: #{aamodel_forward_batched.1} parent=5 // pred_check
      _
    $region46: #{aamodel_forward_batched.1} parent=5 // pred_check_branch
      %242 = sbr.rel (%p239) target = $region48
    $region47: #{aamodel_forward_batched.1} parent=5 // pred_region
      %s243 = ssub.s32 %s13, 1
      %s244 = smul.u32 16, %s18
      %p245 = scmp.lt.s32.totalorder %s244, 31
      %s246 = scalar_select %p245, %s244, 31
      %s247 = smul.addr %s246, 8
      %s248 = scalar_lea.vmem %s0, %s247
      %p249 = pneg %p39
      %p250 = pneg %p36
      %p251 = pneg %p60
      %p252 = pneg %p57
      %p253 = pneg %p81
      %p254 = pneg %p78
      %p255 = pneg %p102
      %p256 = pneg %p99
      %p257 = pneg %p123
      %p258 = pneg %p120
      %p259 = pneg %p144
      %p260 = pneg %p141
      %p261 = pneg %p165
      %p262 = pneg %p162
      %p263 = pneg %p191
      %p264 = pneg %p188
      %s265 = smul.u32 16, %s18
      %p266 = scmp.lt.s32.totalorder %s265, 31
      %s267 = scalar_select %p266, %s265, 31
      %s268 = smul.addr %s267, 8
      %s269 = scalar_lea.vmem %s7, %s268
      %s270 = smul.u32 16, %s18
      %p271 = scmp.lt.s32.totalorder %s270, 31
      %s272 = scalar_select %p271, %s270, 31
      %s273 = smul.addr %s272, 8
      %s274 = scalar_lea.vmem %s0, %s273
      %s275 = smul.u32 16, %s18
      %s276 = smul.u32 16, %s18
      %p277 = scmp.lt.s32.totalorder %s276, 31
      %s278 = scalar_select %p277, %s276, 31
      %s279 = smul.addr %s278, 8
      %s280 = scalar_lea.vmem %s7, %s279
      %s281 = smul.u32 16, %s18
      %v283 = vld [vmem:[%s274] sm:$0xff]
      %v284 = vld [vmem:[%s274 + $0x8] sm:$0xff]
      %v285 = vld [vmem:[%s274 + $0x10] sm:$0xff]
      %v286 = vld [vmem:[%s274 + $0x18] sm:$0xff]
      %v287 = vld [vmem:[%s274 + $0x20] sm:$0xff]
      %v288 = vld [vmem:[%s274 + $0x28] sm:$0xff]
      %v289 = vld [vmem:[%s274 + $0x30] sm:$0xff]
      %v290 = vld [vmem:[%s274 + $0x38] sm:$0xff]
      %v291 = vld [vmem:[%s274 + $0x40] sm:$0xff]
      %v292 = vld [vmem:[%s274 + $0x48] sm:$0xff]
      %v293 = vld [vmem:[%s274 + $0x50] sm:$0xff]
      %v294 = vld [vmem:[%s274 + $0x58] sm:$0xff]
      %v295 = vld [vmem:[%s274 + $0x60] sm:$0xff]
      %v296 = vld [vmem:[%s274 + $0x68] sm:$0xff]
      %v297 = vld [vmem:[%s274 + $0x70] sm:$0xff]
      %v298 = vld [vmem:[%s274 + $0x78] sm:$0xff]
      %v299 = vcvt.s32.f32 %v283
      %v300 = vcvt.s32.f32 %v284
      %v301 = vcvt.s32.f32 %v285
      %v302 = vcvt.s32.f32 %v286
      %v303 = vcvt.s32.f32 %v287
      %v304 = vcvt.s32.f32 %v288
      %v305 = vcvt.s32.f32 %v289
      %v306 = vcvt.s32.f32 %v290
      %v307 = vcvt.s32.f32 %v291
      %v308 = vcvt.s32.f32 %v292
      %v309 = vcvt.s32.f32 %v293
      %v310 = vcvt.s32.f32 %v294
      %v311 = vcvt.s32.f32 %v295
      %v312 = vcvt.s32.f32 %v296
      %v313 = vcvt.s32.f32 %v297
      %v314 = vcvt.s32.f32 %v298
      %v315 = vpack.c.bf16 %v300, %v299
      %v316 = vpack.c.bf16 %v302, %v301
      %v317 = vpack.c.bf16 %v304, %v303
      %v318 = vpack.c.bf16 %v306, %v305
      %v319 = vpack.c.bf16 %v308, %v307
      %v320 = vpack.c.bf16 %v310, %v309
      %v321 = vpack.c.bf16 %v312, %v311
      %v322 = vpack.c.bf16 %v314, %v313
      %v323 = vld [vmem:[%s1] sm:$0xff]
      %v325 = vunpack.c.l.b16 %v323
      %v326 = vunpack.c.h.b16 %v323
      %v327 = vpack.c.b16 %v325, %v325
      %v328 = vpack.c.b16 %v326, %v326
      %vm329 = vcmask 64512
      %v331 = vsel %vm329, %v315, 0
      %v334 = vsel %vm329, %v316, 0
      %v337 = vsel %vm329, %v317, 0
      %v340 = vsel %vm329, %v318, 0
      %v343 = vsel %vm329, %v319, 0
      %v346 = vsel %vm329, %v320, 0
      %v349 = vsel %vm329, %v321, 0
      %v352 = vsel %vm329, %v322, 0
      %vm354 = vcmask 1043456
      %v356 = vsel %vm354, %v327, 0
      %v359 = vsel %vm354, %v328, 0
      %361 = vmatprep.subr.bf16.mxu0 0
      %362 = vmatpush1.bf16.msra.mxu0 0
      %363 = vmatprep.subr.bf16.mxu0 0
      %364 = vmatpush1.bf16.msra.mxu0 0
      %365 = vmatprep.subr.bf16.mxu0 0
      %366 = vmatpush1.bf16.msra.mxu0 0
      %367 = vmatprep.subr.bf16.mxu0 0
      %368 = vmatpush1.bf16.msra.mxu0 0
      %369 = vmatprep.subr.bf16.mxu0 0
      %370 = vmatpush1.bf16.msra.mxu0 0
      %371 = vmatprep.subr.bf16.mxu0 0
      %372 = vmatpush1.bf16.msra.mxu0 0
      %373 = vmatprep.subr.bf16.mxu0 0
      %374 = vmatpush1.bf16.msra.mxu0 0
      %375 = vmatprep.subr.bf16.mxu0 %v359
      %376 = vmatpush1.bf16.msra.mxu0 %v356
      %377 = vmatprep.subr.bf16.mxu0 0
      %378 = vmatpush2.bf16.msra.mxu0 0
      %379 = vmatprep.subr.bf16.mxu0 0
      %380 = vmatpush2.bf16.msra.mxu0 0
      %381 = vmatprep.subr.bf16.mxu0 0
      %382 = vmatpush2.bf16.msra.mxu0 0
      %383 = vmatprep.subr.bf16.mxu0 0
      %384 = vmatpush2.bf16.msra.mxu0 0
      %385 = vmatprep.subr.bf16.mxu0 0
      %386 = vmatpush2.bf16.msra.mxu0 0
      %387 = vmatprep.subr.bf16.mxu0 0
      %388 = vmatpush2.bf16.msra.mxu0 0
      %389 = vmatprep.subr.bf16.mxu0 0
      %390 = vmatpush2.bf16.msra.mxu0 0
      %391 = vmatprep.subr.bf16.mxu0 0
      %392 = vmatpush2.bf16.msra.mxu0 0
      %393 = vmatprep.mubr.bf16.mxu0 0
      %394 = vmatmul.mubr.bf16.gmra.mxu0 %v331
      %v395 = vpop.f32.mrf.mxu0
      %v396 = vadd.f32 0.0, %v395
      %v397 = vpop.f32.mrf.mxu0
      %v398 = vadd.f32 0.0, %v397
      %v399 = vpop.f32.mrf.mxu0
      %v400 = vadd.f32 0.0, %v399
      %v401 = vpop.f32.mrf.mxu0
      %v402 = vadd.f32 0.0, %v401
      %403 = vmatprep.mubr.bf16.mxu0 0
      %404 = vmatmul.mubr.bf16.gmra.mxu0 %v334
      %v405 = vpop.f32.mrf.mxu0
      %v406 = vadd.f32 0.0, %v405
      %v407 = vpop.f32.mrf.mxu0
      %v408 = vadd.f32 0.0, %v407
      %v409 = vpop.f32.mrf.mxu0
      %v410 = vadd.f32 0.0, %v409
      %v411 = vpop.f32.mrf.mxu0
      %v412 = vadd.f32 0.0, %v411
      %413 = vmatprep.mubr.bf16.mxu0 0
      %414 = vmatmul.mubr.bf16.gmra.mxu0 %v337
      %v415 = vpop.f32.mrf.mxu0
      %v416 = vadd.f32 0.0, %v415
      %v417 = vpop.f32.mrf.mxu0
      %v418 = vadd.f32 0.0, %v417
      %v419 = vpop.f32.mrf.mxu0
      %v420 = vadd.f32 0.0, %v419
      %v421 = vpop.f32.mrf.mxu0
      %v422 = vadd.f32 0.0, %v421
      %423 = vmatprep.mubr.bf16.mxu0 0
      %424 = vmatmul.mubr.bf16.gmra.mxu0 %v340
      %v425 = vpop.f32.mrf.mxu0
      %v426 = vadd.f32 0.0, %v425
      %v427 = vpop.f32.mrf.mxu0
      %v428 = vadd.f32 0.0, %v427
      %v429 = vpop.f32.mrf.mxu0
      %v430 = vadd.f32 0.0, %v429
      %v431 = vpop.f32.mrf.mxu0
      %v432 = vadd.f32 0.0, %v431
      %433 = vmatprep.mubr.bf16.mxu0 0
      %434 = vmatmul.mubr.bf16.gmra.mxu0 %v343
      %v435 = vpop.f32.mrf.mxu0
      %v436 = vadd.f32 0.0, %v435
      %v437 = vpop.f32.mrf.mxu0
      %v438 = vadd.f32 0.0, %v437
      %v439 = vpop.f32.mrf.mxu0
      %v440 = vadd.f32 0.0, %v439
      %v441 = vpop.f32.mrf.mxu0
      %v442 = vadd.f32 0.0, %v441
      %443 = vmatprep.mubr.bf16.mxu0 0
      %444 = vmatmul.mubr.bf16.gmra.mxu0 %v346
      %v445 = vpop.f32.mrf.mxu0
      %v446 = vadd.f32 0.0, %v445
      %v447 = vpop.f32.mrf.mxu0
      %v448 = vadd.f32 0.0, %v447
      %v449 = vpop.f32.mrf.mxu0
      %v450 = vadd.f32 0.0, %v449
      %v451 = vpop.f32.mrf.mxu0
      %v452 = vadd.f32 0.0, %v451
      %453 = vmatprep.mubr.bf16.mxu0 0
      %454 = vmatmul.mubr.bf16.gmra.mxu0 %v349
      %v455 = vpop.f32.mrf.mxu0
      %v456 = vadd.f32 0.0, %v455
      %v457 = vpop.f32.mrf.mxu0
      %v458 = vadd.f32 0.0, %v457
      %v459 = vpop.f32.mrf.mxu0
      %v460 = vadd.f32 0.0, %v459
      %v461 = vpop.f32.mrf.mxu0
      %v462 = vadd.f32 0.0, %v461
      %463 = vmatprep.mubr.bf16.mxu0 0
      %464 = vmatmul.mubr.bf16.gmra.mxu0 %v352
      %v465 = vpop.f32.mrf.mxu0
      %v466 = vadd.f32 0.0, %v465
      %v467 = vpop.f32.mrf.mxu0
      %v468 = vadd.f32 0.0, %v467
      %v469 = vpop.f32.mrf.mxu0
      %v470 = vadd.f32 0.0, %v469
      %v471 = vpop.f32.mrf.mxu0
      %v472 = vadd.f32 0.0, %v471
      %473 = vdwg.mxu0
      %v474 = vld [vmem:[%s2] sm:$0x3]
      %v476 = vlaneseq
      %v477 = vshrl.u32 %v476, 7
      %v478 = vsub.s32 0, %v477
      %v479 = vrot.slane %v474, %v478
      %v480 = vlaneseq
      %v481 = vshrl.u32 %v480, 7
      %v482 = vsub.s32 1, %v481
      %v483 = vrot.slane %v474, %v482
      %vm486 = vcmp.eq.f32.partialorder %v396, %v479
      %vm487 = vcmp.eq.f32.partialorder %v398, %v483
      %vm488 = vcmp.eq.f32.partialorder %v400, %v479
      %vm489 = vcmp.eq.f32.partialorder %v402, %v483
      %vm490 = vcmp.eq.f32.partialorder %v406, %v479
      %vm491 = vcmp.eq.f32.partialorder %v408, %v483
      %vm492 = vcmp.eq.f32.partialorder %v410, %v479
      %vm493 = vcmp.eq.f32.partialorder %v412, %v483
      %vm494 = vcmp.eq.f32.partialorder %v416, %v479
      %vm495 = vcmp.eq.f32.partialorder %v418, %v483
      %vm496 = vcmp.eq.f32.partialorder %v420, %v479
      %vm497 = vcmp.eq.f32.partialorder %v422, %v483
      %vm498 = vcmp.eq.f32.partialorder %v426, %v479
      %vm499 = vcmp.eq.f32.partialorder %v428, %v483
      %vm500 = vcmp.eq.f32.partialorder %v430, %v479
      %vm501 = vcmp.eq.f32.partialorder %v432, %v483
      %vm502 = vcmp.eq.f32.partialorder %v436, %v479
      %vm503 = vcmp.eq.f32.partialorder %v438, %v483
      %vm504 = vcmp.eq.f32.partialorder %v440, %v479
      %vm505 = vcmp.eq.f32.partialorder %v442, %v483
      %vm506 = vcmp.eq.f32.partialorder %v446, %v479
      %vm507 = vcmp.eq.f32.partialorder %v448, %v483
      %vm508 = vcmp.eq.f32.partialorder %v450, %v479
      %vm509 = vcmp.eq.f32.partialorder %v452, %v483
      %vm510 = vcmp.eq.f32.partialorder %v456, %v479
      %vm511 = vcmp.eq.f32.partialorder %v458, %v483
      %vm512 = vcmp.eq.f32.partialorder %v460, %v479
      %vm513 = vcmp.eq.f32.partialorder %v462, %v483
      %vm514 = vcmp.eq.f32.partialorder %v466, %v479
      %vm515 = vcmp.eq.f32.partialorder %v468, %v483
      %vm516 = vcmp.eq.f32.partialorder %v470, %v479
      %vm517 = vcmp.eq.f32.partialorder %v472, %v483
      %v518 = vsel %vm486, 1, 0
      %v519 = vsel %vm487, 1, 0
      %v520 = vsel %vm488, 1, 0
      %v521 = vsel %vm489, 1, 0
      %v522 = vsel %vm490, 1, 0
      %v523 = vsel %vm491, 1, 0
      %v524 = vsel %vm492, 1, 0
      %v525 = vsel %vm493, 1, 0
      %v526 = vsel %vm494, 1, 0
      %v527 = vsel %vm495, 1, 0
      %v528 = vsel %vm496, 1, 0
      %v529 = vsel %vm497, 1, 0
      %v530 = vsel %vm498, 1, 0
      %v531 = vsel %vm499, 1, 0
      %v532 = vsel %vm500, 1, 0
      %v533 = vsel %vm501, 1, 0
      %v534 = vsel %vm502, 1, 0
      %v535 = vsel %vm503, 1, 0
      %v536 = vsel %vm504, 1, 0
      %v537 = vsel %vm505, 1, 0
      %v538 = vsel %vm506, 1, 0
      %v539 = vsel %vm507, 1, 0
      %v540 = vsel %vm508, 1, 0
      %v541 = vsel %vm509, 1, 0
      %v542 = vsel %vm510, 1, 0
      %v543 = vsel %vm511, 1, 0
      %v544 = vsel %vm512, 1, 0
      %v545 = vsel %vm513, 1, 0
      %v546 = vsel %vm514, 1, 0
      %v547 = vsel %vm515, 1, 0
      %v548 = vsel %vm516, 1, 0
      %v549 = vsel %vm517, 1, 0
      %v550 = vcvt.s32.f32 %v518
      %v551 = vcvt.s32.f32 %v519
      %v552 = vcvt.s32.f32 %v520
      %v553 = vcvt.s32.f32 %v521
      %v554 = vcvt.s32.f32 %v522
      %v555 = vcvt.s32.f32 %v523
      %v556 = vcvt.s32.f32 %v524
      %v557 = vcvt.s32.f32 %v525
      %v558 = vcvt.s32.f32 %v526
      %v559 = vcvt.s32.f32 %v527
      %v560 = vcvt.s32.f32 %v528
      %v561 = vcvt.s32.f32 %v529
      %v562 = vcvt.s32.f32 %v530
      %v563 = vcvt.s32.f32 %v531
      %v564 = vcvt.s32.f32 %v532
      %v565 = vcvt.s32.f32 %v533
      %v566 = vcvt.s32.f32 %v534
      %v567 = vcvt.s32.f32 %v535
      %v568 = vcvt.s32.f32 %v536
      %v569 = vcvt.s32.f32 %v537
      %v570 = vcvt.s32.f32 %v538
      %v571 = vcvt.s32.f32 %v539
      %v572 = vcvt.s32.f32 %v540
      %v573 = vcvt.s32.f32 %v541
      %v574 = vcvt.s32.f32 %v542
      %v575 = vcvt.s32.f32 %v543
      %v576 = vcvt.s32.f32 %v544
      %v577 = vcvt.s32.f32 %v545
      %v578 = vcvt.s32.f32 %v546
      %v579 = vcvt.s32.f32 %v547
      %v580 = vcvt.s32.f32 %v548
      %v581 = vcvt.s32.f32 %v549
      %v582 = vpack.c.bf16 %v552, %v550
      %v583 = vpack.c.bf16 %v553, %v551
      %v584 = vpack.c.bf16 %v556, %v554
      %v585 = vpack.c.bf16 %v557, %v555
      %v586 = vpack.c.bf16 %v560, %v558
      %v587 = vpack.c.bf16 %v561, %v559
      %v588 = vpack.c.bf16 %v564, %v562
      %v589 = vpack.c.bf16 %v565, %v563
      %v590 = vpack.c.bf16 %v568, %v566
      %v591 = vpack.c.bf16 %v569, %v567
      %v592 = vpack.c.bf16 %v572, %v570
      %v593 = vpack.c.bf16 %v573, %v571
      %v594 = vpack.c.bf16 %v576, %v574
      %v595 = vpack.c.bf16 %v577, %v575
      %v596 = vpack.c.bf16 %v580, %v578
      %v597 = vpack.c.bf16 %v581, %v579
      %v598 = vld [vmem:[%s3] sm:$0xf]
      %v599 = vld [vmem:[%s3 + $0x4] sm:$0xf]
      %v600 = vld [vmem:[%s3 + $0x8] sm:$0xf]
      %v601 = vld [vmem:[%s3 + $0xc] sm:$0xf]
      %v602 = vld [vmem:[%s3 + $0x10] sm:$0xf]
      %v603 = vld [vmem:[%s3 + $0x14] sm:$0xf]
      %v604 = vld [vmem:[%s3 + $0x18] sm:$0xf]
      %v605 = vld [vmem:[%s3 + $0x1c] sm:$0xf]
      %v606 = vld [vmem:[%s3 + $0x20] sm:$0xf]
      %v607 = vld [vmem:[%s3 + $0x24] sm:$0xf]
      %v608 = vld [vmem:[%s3 + $0x28] sm:$0xf]
      %v609 = vld [vmem:[%s3 + $0x2c] sm:$0xf]
      %v610 = vld [vmem:[%s3 + $0x30] sm:$0xf]
      %v611 = vld [vmem:[%s3 + $0x34] sm:$0xf]
      %v612 = vld [vmem:[%s3 + $0x38] sm:$0xf]
      %v613 = vld [vmem:[%s3 + $0x3c] sm:$0xf]
      %v614 = vld [vmem:[%s3 + $0x40] sm:$0xf]
      %v615 = vld [vmem:[%s3 + $0x44] sm:$0xf]
      %v616 = vld [vmem:[%s3 + $0x48] sm:$0xf]
      %v617 = vld [vmem:[%s3 + $0x4c] sm:$0xf]
      %v618 = vld [vmem:[%s3 + $0x50] sm:$0xf]
      %v619 = vld [vmem:[%s3 + $0x54] sm:$0xf]
      %v620 = vld [vmem:[%s3 + $0x58] sm:$0xf]
      %v621 = vld [vmem:[%s3 + $0x5c] sm:$0xf]
      %v622 = vld [vmem:[%s3 + $0x60] sm:$0xf]
      %v623 = vld [vmem:[%s3 + $0x64] sm:$0xf]
      %v624 = vld [vmem:[%s3 + $0x68] sm:$0xf]
      %v625 = vld [vmem:[%s3 + $0x6c] sm:$0xf]
      %v626 = vld [vmem:[%s3 + $0x70] sm:$0xf]
      %v627 = vld [vmem:[%s3 + $0x74] sm:$0xf]
      %v628 = vld [vmem:[%s3 + $0x78] sm:$0xf]
      %v629 = vld [vmem:[%s3 + $0x7c] sm:$0xf]
      %v630 = vld [vmem:[%s4] sm:$0x1]
      %v632 = vlaneseq
      %v633 = vshrl.u32 %v632, 7
      %v634 = vsub.s32 0, %v633
      %v635 = vrot.slane %v630, %v634
      %v669 = vunpack.c.l.b16 %v598
      %v670 = vunpack.c.l.b16 %v599
      %v671 = vunpack.c.l.b16 %v600
      %v672 = vunpack.c.l.b16 %v601
      %v673 = vunpack.c.l.b16 %v602
      %v674 = vunpack.c.l.b16 %v603
      %v675 = vunpack.c.l.b16 %v604
      %v676 = vunpack.c.l.b16 %v605
      %v677 = vunpack.c.l.b16 %v606
      %v678 = vunpack.c.l.b16 %v607
      %v679 = vunpack.c.l.b16 %v608
      %v680 = vunpack.c.l.b16 %v609
      %v681 = vunpack.c.l.b16 %v610
      %v682 = vunpack.c.l.b16 %v611
      %v683 = vunpack.c.l.b16 %v612
      %v684 = vunpack.c.l.b16 %v613
      %v685 = vunpack.c.l.b16 %v614
      %v686 = vunpack.c.l.b16 %v615
      %v687 = vunpack.c.l.b16 %v616
      %v688 = vunpack.c.l.b16 %v617
      %v689 = vunpack.c.l.b16 %v618
      %v690 = vunpack.c.l.b16 %v619
      %v691 = vunpack.c.l.b16 %v620
      %v692 = vunpack.c.l.b16 %v621
      %v693 = vunpack.c.l.b16 %v622
      %v694 = vunpack.c.l.b16 %v623
      %v695 = vunpack.c.l.b16 %v624
      %v696 = vunpack.c.l.b16 %v625
      %v697 = vunpack.c.l.b16 %v626
      %v698 = vunpack.c.l.b16 %v627
      %v699 = vunpack.c.l.b16 %v628
      %v700 = vunpack.c.l.b16 %v629
      %v701 = vpack.c.b16 %v670, %v669
      %v702 = vpack.c.b16 %v672, %v671
      %v703 = vpack.c.b16 %v674, %v673
      %v704 = vpack.c.b16 %v676, %v675
      %v705 = vpack.c.b16 %v678, %v677
      %v706 = vpack.c.b16 %v680, %v679
      %v707 = vpack.c.b16 %v682, %v681
      %v708 = vpack.c.b16 %v684, %v683
      %v709 = vpack.c.b16 %v686, %v685
      %v710 = vpack.c.b16 %v688, %v687
      %v711 = vpack.c.b16 %v690, %v689
      %v712 = vpack.c.b16 %v692, %v691
      %v713 = vpack.c.b16 %v694, %v693
      %v714 = vpack.c.b16 %v696, %v695
      %v715 = vpack.c.b16 %v698, %v697
      %v716 = vpack.c.b16 %v700, %v699
      %733 = vmatprep.subr.bf16.mxu0 0
      %734 = vmatpush1.bf16.msra.mxu0 %v708
      %735 = vmatprep.subr.bf16.mxu0 0
      %736 = vmatpush1.bf16.msra.mxu0 %v707
      %737 = vmatprep.subr.bf16.mxu0 0
      %738 = vmatpush1.bf16.msra.mxu0 %v706
      %739 = vmatprep.subr.bf16.mxu0 0
      %740 = vmatpush1.bf16.msra.mxu0 %v705
      %741 = vmatprep.subr.bf16.mxu0 0
      %742 = vmatpush1.bf16.msra.mxu0 %v704
      %743 = vmatprep.subr.bf16.mxu0 0
      %744 = vmatpush1.bf16.msra.mxu0 %v703
      %745 = vmatprep.subr.bf16.mxu0 0
      %746 = vmatpush1.bf16.msra.mxu0 %v702
      %747 = vmatprep.subr.bf16.mxu0 0
      %748 = vmatpush1.bf16.msra.mxu0 %v701
      %749 = vmatprep.subr.bf16.mxu0 0
      %750 = vmatpush2.bf16.msra.mxu0 %v716
      %751 = vmatprep.subr.bf16.mxu0 0
      %752 = vmatpush2.bf16.msra.mxu0 %v715
      %753 = vmatprep.subr.bf16.mxu0 0
      %754 = vmatpush2.bf16.msra.mxu0 %v714
      %755 = vmatprep.subr.bf16.mxu0 0
      %756 = vmatpush2.bf16.msra.mxu0 %v713
      %757 = vmatprep.subr.bf16.mxu0 0
      %758 = vmatpush2.bf16.msra.mxu0 %v712
      %759 = vmatprep.subr.bf16.mxu0 0
      %760 = vmatpush2.bf16.msra.mxu0 %v711
      %761 = vmatprep.subr.bf16.mxu0 0
      %762 = vmatpush2.bf16.msra.mxu0 %v710
      %763 = vmatprep.subr.bf16.mxu0 0
      %764 = vmatpush2.bf16.msra.mxu0 %v709
      %765 = vmatprep.mubr.bf16.mxu0 %v583
      %766 = vmatmul.mubr.bf16.gmra.mxu0 %v582
      %v767 = vpop.f32.mrf.mxu0
      %v768 = vadd.f32 %v635, %v767
      %v769 = vpop.f32.mrf.mxu0
      %v770 = vpop.f32.mrf.mxu0
      %v771 = vadd.f32 %v635, %v770
      %v772 = vpop.f32.mrf.mxu0
      %773 = vmatprep.mubr.bf16.mxu0 %v585
      %774 = vmatmul.mubr.bf16.gmra.mxu0 %v584
      %v775 = vpop.f32.mrf.mxu0
      %v776 = vadd.f32 %v635, %v775
      %v777 = vpop.f32.mrf.mxu0
      %v778 = vpop.f32.mrf.mxu0
      %v779 = vadd.f32 %v635, %v778
      %v780 = vpop.f32.mrf.mxu0
      %781 = vmatprep.mubr.bf16.mxu0 %v587
      %782 = vmatmul.mubr.bf16.gmra.mxu0 %v586
      %v783 = vpop.f32.mrf.mxu0
      %v784 = vadd.f32 %v635, %v783
      %v785 = vpop.f32.mrf.mxu0
      %v786 = vpop.f32.mrf.mxu0
      %v787 = vadd.f32 %v635, %v786
      %v788 = vpop.f32.mrf.mxu0
      %789 = vmatprep.mubr.bf16.mxu0 %v589
      %790 = vmatmul.mubr.bf16.gmra.mxu0 %v588
      %v791 = vpop.f32.mrf.mxu0
      %v792 = vadd.f32 %v635, %v791
      %v793 = vpop.f32.mrf.mxu0
      %v794 = vpop.f32.mrf.mxu0
      %v795 = vadd.f32 %v635, %v794
      %v796 = vpop.f32.mrf.mxu0
      %797 = vmatprep.mubr.bf16.mxu0 %v591
      %798 = vmatmul.mubr.bf16.gmra.mxu0 %v590
      %v799 = vpop.f32.mrf.mxu0
      %v800 = vadd.f32 %v635, %v799
      %v801 = vpop.f32.mrf.mxu0
      %v802 = vpop.f32.mrf.mxu0
      %v803 = vadd.f32 %v635, %v802
      %v804 = vpop.f32.mrf.mxu0
      %805 = vmatprep.mubr.bf16.mxu0 %v593
      %806 = vmatmul.mubr.bf16.gmra.mxu0 %v592
      %v807 = vpop.f32.mrf.mxu0
      %v808 = vadd.f32 %v635, %v807
      %v809 = vpop.f32.mrf.mxu0
      %v810 = vpop.f32.mrf.mxu0
      %v811 = vadd.f32 %v635, %v810
      %v812 = vpop.f32.mrf.mxu0
      %813 = vmatprep.mubr.bf16.mxu0 %v595
      %814 = vmatmul.mubr.bf16.gmra.mxu0 %v594
      %v815 = vpop.f32.mrf.mxu0
      %v816 = vadd.f32 %v635, %v815
      %v817 = vpop.f32.mrf.mxu0
      %v818 = vpop.f32.mrf.mxu0
      %v819 = vadd.f32 %v635, %v818
      %v820 = vpop.f32.mrf.mxu0
      %821 = vmatprep.mubr.bf16.mxu0 %v597
      %822 = vmatmul.mubr.bf16.gmra.mxu0 %v596
      %v823 = vpop.f32.mrf.mxu0
      %v824 = vadd.f32 %v635, %v823
      %v825 = vpop.f32.mrf.mxu0
      %v826 = vpop.f32.mrf.mxu0
      %v827 = vadd.f32 %v635, %v826
      %v828 = vpop.f32.mrf.mxu0
      %829 = vdwg.mxu0
      %v830 = vmax.f32 %v768, 0.0
      %v831 = vmax.f32 %v771, 0.0
      %v832 = vmax.f32 %v776, 0.0
      %v833 = vmax.f32 %v779, 0.0
      %v834 = vmax.f32 %v784, 0.0
      %v835 = vmax.f32 %v787, 0.0
      %v836 = vmax.f32 %v792, 0.0
      %v837 = vmax.f32 %v795, 0.0
      %v838 = vmax.f32 %v800, 0.0
      %v839 = vmax.f32 %v803, 0.0
      %v840 = vmax.f32 %v808, 0.0
      %v841 = vmax.f32 %v811, 0.0
      %v842 = vmax.f32 %v816, 0.0
      %v843 = vmax.f32 %v819, 0.0
      %v844 = vmax.f32 %v824, 0.0
      %v845 = vmax.f32 %v827, 0.0
      %v846 = vpack.c.bf16 %v831, %v830
      %v847 = vpack.c.bf16 %v833, %v832
      %v848 = vpack.c.bf16 %v835, %v834
      %v849 = vpack.c.bf16 %v837, %v836
      %v850 = vpack.c.bf16 %v839, %v838
      %v851 = vpack.c.bf16 %v841, %v840
      %v852 = vpack.c.bf16 %v843, %v842
      %v853 = vpack.c.bf16 %v845, %v844
      %v854 = vld [vmem:[%s5] sm:$0xf]
      %v855 = vld [vmem:[%s5 + $0x4] sm:$0xf]
      %v856 = vld [vmem:[%s5 + $0x8] sm:$0xf]
      %v857 = vld [vmem:[%s5 + $0xc] sm:$0xf]
      %v858 = vld [vmem:[%s6] sm:$0x1]
      %v860 = vlaneseq
      %v861 = vshrl.u32 %v860, 7
      %v862 = vsub.s32 0, %v861
      %v863 = vrot.slane %v858, %v862
      %v869 = vunpack.c.l.b16 %v854
      %v870 = vunpack.c.l.b16 %v855
      %v871 = vunpack.c.l.b16 %v856
      %v872 = vunpack.c.l.b16 %v857
      %v873 = vpack.c.b16 %v870, %v869
      %v874 = vpack.c.b16 %v872, %v871
      %vm877 = vcmask 261120
      %v879 = vsel %vm877, %v846, 0
      %v882 = vsel %vm877, %v847, 0
      %v885 = vsel %vm877, %v848, 0
      %v888 = vsel %vm877, %v849, 0
      %v891 = vsel %vm877, %v850, 0
      %v894 = vsel %vm877, %v851, 0
      %v897 = vsel %vm877, %v852, 0
      %v900 = vsel %vm877, %v853, 0
      %902 = vmatprep.subr.bf16.mxu0 0
      %903 = vmatpush1.bf16.msra.mxu0 0
      %904 = vmatprep.subr.bf16.mxu0 0
      %905 = vmatpush1.bf16.msra.mxu0 0
      %906 = vmatprep.subr.bf16.mxu0 0
      %907 = vmatpush1.bf16.msra.mxu0 0
      %908 = vmatprep.subr.bf16.mxu0 0
      %909 = vmatpush1.bf16.msra.mxu0 0
      %910 = vmatprep.subr.bf16.mxu0 0
      %911 = vmatpush1.bf16.msra.mxu0 0
      %912 = vmatprep.subr.bf16.mxu0 0
      %913 = vmatpush1.bf16.msra.mxu0 0
      %914 = vmatprep.subr.bf16.mxu0 0
      %915 = vmatpush1.bf16.msra.mxu0 %v874
      %916 = vmatprep.subr.bf16.mxu0 0
      %917 = vmatpush1.bf16.msra.mxu0 %v873
      %918 = vmatprep.subr.bf16.mxu0 0
      %919 = vmatpush2.bf16.msra.mxu0 0
      %920 = vmatprep.subr.bf16.mxu0 0
      %921 = vmatpush2.bf16.msra.mxu0 0
      %922 = vmatprep.subr.bf16.mxu0 0
      %923 = vmatpush2.bf16.msra.mxu0 0
      %924 = vmatprep.subr.bf16.mxu0 0
      %925 = vmatpush2.bf16.msra.mxu0 0
      %926 = vmatprep.subr.bf16.mxu0 0
      %927 = vmatpush2.bf16.msra.mxu0 0
      %928 = vmatprep.subr.bf16.mxu0 0
      %929 = vmatpush2.bf16.msra.mxu0 0
      %930 = vmatprep.subr.bf16.mxu0 0
      %931 = vmatpush2.bf16.msra.mxu0 0
      %932 = vmatprep.subr.bf16.mxu0 0
      %933 = vmatpush2.bf16.msra.mxu0 0
      %934 = vmatprep.mubr.bf16.mxu0 0
      %935 = vmatmul.mubr.bf16.gmra.mxu0 %v879
      %v936 = vpop.f32.mrf.mxu0
      %v937 = vadd.f32 %v863, %v936
      %v938 = vpop.f32.mrf.mxu0
      %v939 = vpop.f32.mrf.mxu0
      %v940 = vadd.f32 %v863, %v939
      %v941 = vpop.f32.mrf.mxu0
      %942 = vmatprep.mubr.bf16.mxu0 0
      %943 = vmatmul.mubr.bf16.gmra.mxu0 %v882
      %v944 = vpop.f32.mrf.mxu0
      %v945 = vadd.f32 %v863, %v944
      %v946 = vpop.f32.mrf.mxu0
      %v947 = vpop.f32.mrf.mxu0
      %v948 = vadd.f32 %v863, %v947
      %v949 = vpop.f32.mrf.mxu0
      %950 = vmatprep.mubr.bf16.mxu0 0
      %951 = vmatmul.mubr.bf16.gmra.mxu0 %v885
      %v952 = vpop.f32.mrf.mxu0
      %v953 = vadd.f32 %v863, %v952
      %v954 = vpop.f32.mrf.mxu0
      %v955 = vpop.f32.mrf.mxu0
      %v956 = vadd.f32 %v863, %v955
      %v957 = vpop.f32.mrf.mxu0
      %958 = vmatprep.mubr.bf16.mxu0 0
      %959 = vmatmul.mubr.bf16.gmra.mxu0 %v888
      %v960 = vpop.f32.mrf.mxu0
      %v961 = vadd.f32 %v863, %v960
      %v962 = vpop.f32.mrf.mxu0
      %v963 = vpop.f32.mrf.mxu0
      %v964 = vadd.f32 %v863, %v963
      %v965 = vpop.f32.mrf.mxu0
      %966 = vmatprep.mubr.bf16.mxu0 0
      %967 = vmatmul.mubr.bf16.gmra.mxu0 %v891
      %v968 = vpop.f32.mrf.mxu0
      %v969 = vadd.f32 %v863, %v968
      %v970 = vpop.f32.mrf.mxu0
      %v971 = vpop.f32.mrf.mxu0
      %v972 = vadd.f32 %v863, %v971
      %v973 = vpop.f32.mrf.mxu0
      %974 = vmatprep.mubr.bf16.mxu0 0
      %975 = vmatmul.mubr.bf16.gmra.mxu0 %v894
      %v976 = vpop.f32.mrf.mxu0
      %v977 = vadd.f32 %v863, %v976
      %v978 = vpop.f32.mrf.mxu0
      %v979 = vpop.f32.mrf.mxu0
      %v980 = vadd.f32 %v863, %v979
      %v981 = vpop.f32.mrf.mxu0
      %982 = vmatprep.mubr.bf16.mxu0 0
      %983 = vmatmul.mubr.bf16.gmra.mxu0 %v897
      %v984 = vpop.f32.mrf.mxu0
      %v985 = vadd.f32 %v863, %v984
      %v986 = vpop.f32.mrf.mxu0
      %v987 = vpop.f32.mrf.mxu0
      %v988 = vadd.f32 %v863, %v987
      %v989 = vpop.f32.mrf.mxu0
      %990 = vmatprep.mubr.bf16.mxu0 0
      %991 = vmatmul.mubr.bf16.gmra.mxu0 %v900
      %v992 = vpop.f32.mrf.mxu0
      %v993 = vadd.f32 %v863, %v992
      %v994 = vpop.f32.mrf.mxu0
      %v995 = vpop.f32.mrf.mxu0
      %v996 = vadd.f32 %v863, %v995
      %v997 = vpop.f32.mrf.mxu0
      %998 = vdwg.mxu0
      %999 = vmax.xlane.f32.xlu0 %v937
      %v1000 = vpop.xlane.xlu0 %999
      %1001 = vmax.xlane.f32.xlu0 %v940
      %v1002 = vpop.xlane.xlu0 %1001
      %1003 = vmax.xlane.f32.xlu0 %v945
      %v1004 = vpop.xlane.xlu0 %1003
      %1005 = vmax.xlane.f32.xlu0 %v948
      %v1006 = vpop.xlane.xlu0 %1005
      %1007 = vmax.xlane.f32.xlu0 %v953
      %v1008 = vpop.xlane.xlu0 %1007
      %1009 = vmax.xlane.f32.xlu0 %v956
      %v1010 = vpop.xlane.xlu0 %1009
      %1011 = vmax.xlane.f32.xlu0 %v961
      %v1012 = vpop.xlane.xlu0 %1011
      %1013 = vmax.xlane.f32.xlu0 %v964
      %v1014 = vpop.xlane.xlu0 %1013
      %1015 = vmax.xlane.f32.xlu0 %v969
      %v1016 = vpop.xlane.xlu0 %1015
      %1017 = vmax.xlane.f32.xlu0 %v972
      %v1018 = vpop.xlane.xlu0 %1017
      %1019 = vmax.xlane.f32.xlu0 %v977
      %v1020 = vpop.xlane.xlu0 %1019
      %1021 = vmax.xlane.f32.xlu0 %v980
      %v1022 = vpop.xlane.xlu0 %1021
      %1023 = vmax.xlane.f32.xlu0 %v985
      %v1024 = vpop.xlane.xlu0 %1023
      %1025 = vmax.xlane.f32.xlu0 %v988
      %v1026 = vpop.xlane.xlu0 %1025
      %1027 = vmax.xlane.f32.xlu0 %v993
      %v1028 = vpop.xlane.xlu0 %1027
      %1029 = vmax.xlane.f32.xlu0 %v996
      %v1030 = vpop.xlane.xlu0 %1029
      %v1031 = vsub.f32 %v937, %v1000
      %v1032 = vsub.f32 %v940, %v1002
      %v1033 = vsub.f32 %v945, %v1004
      %v1034 = vsub.f32 %v948, %v1006
      %v1035 = vsub.f32 %v953, %v1008
      %v1036 = vsub.f32 %v956, %v1010
      %v1037 = vsub.f32 %v961, %v1012
      %v1038 = vsub.f32 %v964, %v1014
      %v1039 = vsub.f32 %v969, %v1016
      %v1040 = vsub.f32 %v972, %v1018
      %v1041 = vsub.f32 %v977, %v1020
      %v1042 = vsub.f32 %v980, %v1022
      %v1043 = vsub.f32 %v985, %v1024
      %v1044 = vsub.f32 %v988, %v1026
      %v1045 = vsub.f32 %v993, %v1028
      %v1046 = vsub.f32 %v996, %v1030
      %v1047 = vmul.f32 %v1031, 1.442695
      %v1048 = vpow.pop %v1047
      %v1049 = vmul.f32 %v1032, 1.442695
      %v1050 = vpow.pop %v1049
      %v1051 = vmul.f32 %v1033, 1.442695
      %v1052 = vpow.pop %v1051
      %v1053 = vmul.f32 %v1034, 1.442695
      %v1054 = vpow.pop %v1053
      %v1055 = vmul.f32 %v1035, 1.442695
      %v1056 = vpow.pop %v1055
      %v1057 = vmul.f32 %v1036, 1.442695
      %v1058 = vpow.pop %v1057
      %v1059 = vmul.f32 %v1037, 1.442695
      %v1060 = vpow.pop %v1059
      %v1061 = vmul.f32 %v1038, 1.442695
      %v1062 = vpow.pop %v1061
      %v1063 = vmul.f32 %v1039, 1.442695
      %v1064 = vpow.pop %v1063
      %v1065 = vmul.f32 %v1040, 1.442695
      %v1066 = vpow.pop %v1065
      %v1067 = vmul.f32 %v1041, 1.442695
      %v1068 = vpow.pop %v1067
      %v1069 = vmul.f32 %v1042, 1.442695
      %v1070 = vpow.pop %v1069
      %v1071 = vmul.f32 %v1043, 1.442695
      %v1072 = vpow.pop %v1071
      %v1073 = vmul.f32 %v1044, 1.442695
      %v1074 = vpow.pop %v1073
      %v1075 = vmul.f32 %v1045, 1.442695
      %v1076 = vpow.pop %v1075
      %v1077 = vmul.f32 %v1046, 1.442695
      %v1078 = vpow.pop %v1077
      %1079 = vadd.xlane.f32.xlu0 %v1048
      %v1080 = vpop.xlane.xlu0 %1079
      %1081 = vadd.xlane.f32.xlu0 %v1050
      %v1082 = vpop.xlane.xlu0 %1081
      %1083 = vadd.xlane.f32.xlu0 %v1052
      %v1084 = vpop.xlane.xlu0 %1083
      %1085 = vadd.xlane.f32.xlu0 %v1054
      %v1086 = vpop.xlane.xlu0 %1085
      %1087 = vadd.xlane.f32.xlu0 %v1056
      %v1088 = vpop.xlane.xlu0 %1087
      %1089 = vadd.xlane.f32.xlu0 %v1058
      %v1090 = vpop.xlane.xlu0 %1089
      %1091 = vadd.xlane.f32.xlu0 %v1060
      %v1092 = vpop.xlane.xlu0 %1091
      %1093 = vadd.xlane.f32.xlu0 %v1062
      %v1094 = vpop.xlane.xlu0 %1093
      %1095 = vadd.xlane.f32.xlu0 %v1064
      %v1096 = vpop.xlane.xlu0 %1095
      %1097 = vadd.xlane.f32.xlu0 %v1066
      %v1098 = vpop.xlane.xlu0 %1097
      %1099 = vadd.xlane.f32.xlu0 %v1068
      %v1100 = vpop.xlane.xlu0 %1099
      %1101 = vadd.xlane.f32.xlu0 %v1070
      %v1102 = vpop.xlane.xlu0 %1101
      %1103 = vadd.xlane.f32.xlu0 %v1072
      %v1104 = vpop.xlane.xlu0 %1103
      %1105 = vadd.xlane.f32.xlu0 %v1074
      %v1106 = vpop.xlane.xlu0 %1105
      %1107 = vadd.xlane.f32.xlu0 %v1076
      %v1108 = vpop.xlane.xlu0 %1107
      %1109 = vadd.xlane.f32.xlu0 %v1078
      %v1110 = vpop.xlane.xlu0 %1109
      %v1111 = vlog2.pop %v1080
      %v1112 = vmul.f32 %v1111, 0.6931472
      %v1113 = vlog2.pop %v1082
      %v1114 = vmul.f32 %v1113, 0.6931472
      %v1115 = vlog2.pop %v1084
      %v1116 = vmul.f32 %v1115, 0.6931472
      %v1117 = vlog2.pop %v1086
      %v1118 = vmul.f32 %v1117, 0.6931472
      %v1119 = vlog2.pop %v1088
      %v1120 = vmul.f32 %v1119, 0.6931472
      %v1121 = vlog2.pop %v1090
      %v1122 = vmul.f32 %v1121, 0.6931472
      %v1123 = vlog2.pop %v1092
      %v1124 = vmul.f32 %v1123, 0.6931472
      %v1125 = vlog2.pop %v1094
      %v1126 = vmul.f32 %v1125, 0.6931472
      %v1127 = vlog2.pop %v1096
      %v1128 = vmul.f32 %v1127, 0.6931472
      %v1129 = vlog2.pop %v1098
      %v1130 = vmul.f32 %v1129, 0.6931472
      %v1131 = vlog2.pop %v1100
      %v1132 = vmul.f32 %v1131, 0.6931472
      %v1133 = vlog2.pop %v1102
      %v1134 = vmul.f32 %v1133, 0.6931472
      %v1135 = vlog2.pop %v1104
      %v1136 = vmul.f32 %v1135, 0.6931472
      %v1137 = vlog2.pop %v1106
      %v1138 = vmul.f32 %v1137, 0.6931472
      %v1139 = vlog2.pop %v1108
      %v1140 = vmul.f32 %v1139, 0.6931472
      %v1141 = vlog2.pop %v1110
      %v1142 = vmul.f32 %v1141, 0.6931472
      %v1143 = vsub.f32 %v1031, %v1112
      %v1144 = vsub.f32 %v1032, %v1114
      %v1145 = vsub.f32 %v1033, %v1116
      %v1146 = vsub.f32 %v1034, %v1118
      %v1147 = vsub.f32 %v1035, %v1120
      %v1148 = vsub.f32 %v1036, %v1122
      %v1149 = vsub.f32 %v1037, %v1124
      %v1150 = vsub.f32 %v1038, %v1126
      %v1151 = vsub.f32 %v1039, %v1128
      %v1152 = vsub.f32 %v1040, %v1130
      %v1153 = vsub.f32 %v1041, %v1132
      %v1154 = vsub.f32 %v1042, %v1134
      %v1155 = vsub.f32 %v1043, %v1136
      %v1156 = vsub.f32 %v1044, %v1138
      %v1157 = vsub.f32 %v1045, %v1140
      %v1158 = vsub.f32 %v1046, %v1142
      %1159 = vst [vmem:[%s280] sm:$0xff] %v1143
      %1160 = vst [vmem:[%s280 + $0x8] sm:$0xff] %v1144
      %1161 = vst [vmem:[%s280 + $0x10] sm:$0xff] %v1145
      %1162 = vst [vmem:[%s280 + $0x18] sm:$0xff] %v1146
      %1163 = vst [vmem:[%s280 + $0x20] sm:$0xff] %v1147
      %1164 = vst [vmem:[%s280 + $0x28] sm:$0xff] %v1148
      %1165 = vst [vmem:[%s280 + $0x30] sm:$0xff] %v1149
      %1166 = vst [vmem:[%s280 + $0x38] sm:$0xff] %v1150
      %1167 = vst [vmem:[%s280 + $0x40] sm:$0xff] %v1151
      %1168 = vst [vmem:[%s280 + $0x48] sm:$0xff] %v1152
      %1169 = vst [vmem:[%s280 + $0x50] sm:$0xff] %v1153
      %1170 = vst [vmem:[%s280 + $0x58] sm:$0xff] %v1154
      %1171 = vst [vmem:[%s280 + $0x60] sm:$0xff] %v1155
      %1172 = vst [vmem:[%s280 + $0x68] sm:$0xff] %v1156
      %1173 = vst [vmem:[%s280 + $0x70] sm:$0xff] %v1157
      %1174 = vst [vmem:[%s280 + $0x78] sm:$0xff] %v1158
      %s1175 = smul.u32 16, %s18
      %p1176 = scmp.lt.s32.totalorder %s1175, 31
      %s1177 = scalar_select %p1176, %s1175, 31
      %s1178 = smul.addr %s1177, 8
      %s1179 = scalar_lea.vmem %s7, %s1178
      // Predicated region
      $region49: #{aamodel_forward_batched.1} parent=47 // pred_check
        %p1180 = pneg %p188
      $region50: #{aamodel_forward_batched.1} parent=47 // pred_check_branch
        %1182 = sbr.rel (%p1180) target = $region52
      $region51: #{aamodel_forward_batched.1} parent=47 // pred_region
        %s1183 = smul.u32 16, %s18
      $region52: #{aamodel_forward_batched.1} parent=47 // pred_fallthru
        _
    $region48: #{aamodel_forward_batched.1} parent=5 // pred_fallthru
      _
    %p1184 = scmp.le.s32.totalorder 2, %s13
    // Predicated region
    $region53: #{aamodel_forward_batched.1} parent=5 // pred_check
      %p1185 = pneg %p1184
    $region54: #{aamodel_forward_batched.1} parent=5 // pred_check_branch
      %1187 = sbr.rel (%p1185) target = $region56
    $region55: #{aamodel_forward_batched.1} parent=5 // pred_region
      %s1188 = ssub.s32 %s13, 2
      // Predicated region
      $region57: #{aamodel_forward_batched.1} parent=55 // pred_check
        %p1189 = pneg %p194
      $region58: #{aamodel_forward_batched.1} parent=55 // pred_check_branch
        %1191 = sbr.rel (%p1189) target = $region60
      $region59: #{aamodel_forward_batched.1} parent=55 // pred_region
        %s1192 = smul.u32 16, %s19
        %p1193 = scmp.lt.s32.totalorder %s1192, 31
        %s1194 = scalar_select %p1193, %s1192, 31
        %s1195 = smul.addr %s1194, 8
        %s1196 = scalar_lea.vmem %s7, %s1195
      $region60: #{aamodel_forward_batched.1} parent=55 // pred_fallthru
        _
    $region56: #{aamodel_forward_batched.1} parent=5 // pred_fallthru
      _
  $region6: #{aamodel_forward_batched.1} parent=0 // loop_footer
    %s17 = sadd.s32 1, %s13
  $region7: #{aamodel_forward_batched.1} parent=0 // loop_footer_branch
    %12 = sbr.rel target = $region3
  $region8: #{aamodel_forward_batched.1} parent=0 // loop_exit
    _

</llo_original>
